<compile_context>
chip_gen: v7x
topology: tpu7x:2x2x1
jax: 0.10.0
libtpu: 0.0.40
codegen_flags: <defaults>
</compile_context>

<pallas_src>
import functools

import jax
import jax.numpy as jnp
from jax.experimental import pallas as pl
from jax.experimental.pallas import tpu as pltpu


def attention_kernel(x_ref, w1_ref, b1_ref, w2_ref, b2_ref, ctx_ref, attn_ref,
                     *, tb, seq):
    # Linear(D -> H) + tanh.  x_ref is read at each use (short live ranges
    # reduce vreg pressure; the data already sits in VMEM).
    h = jnp.tanh(
        jnp.dot(x_ref[...], w1_ref[...], preferred_element_type=jnp.float32)
        + b1_ref[...]
    )                                               # (tb*seq, H) f32

    # Linear(H -> 1) as a VPU multiply + lane reduction; b2 is an SMEM scalar.
    scores = jnp.sum(h * w2_ref[...], axis=-1, keepdims=True) + b2_ref[0]

    # Segmented softmax over the seq axis on a lane-dense (tb, seq) layout.
    # Padded (out-of-range) batch rows in the last block stay confined to their
    # own rows and their writes are clipped by Pallas.
    s = scores.reshape(tb, seq)
    m = jnp.max(s, axis=-1, keepdims=True)
    e = jnp.exp(s - m)
    denom = jnp.sum(e, axis=-1, keepdims=True)
    w = e * pl.reciprocal(denom, approx=True)       # (tb, seq) f32, EUP recip

    attn_ref[...] = w.astype(attn_ref.dtype)

    # context = attn * x ; multiply in f32 (v5e has no bf16 VPU path), cast only
    # at the store.
    ctx_ref[...] = (
        w.reshape(tb * seq, 1) * x_ref[...].astype(jnp.float32)
    ).astype(ctx_ref.dtype)


def _vmem_capacity_bytes():
    """Physical VMEM per TensorCore; conservative default if the query fails."""
    try:
        info = pltpu.get_tpu_info()
        for name in ("vmem_capacity_bytes", "vmem_size_bytes", "vmem_bytes"):
            val = getattr(info, name, None)
            if val:
                return int(val)
    except Exception:
        pass
    return 64 * 1024 * 1024   # safe on every generation (v7x floor)


def _vmem_limit_bytes():
    cap = _vmem_capacity_bytes()
    # ~3/4 of physical, capped at 96 MiB: 96 MiB on 128 MiB v5e/v6e,
    # 48 MiB on 64 MiB v7x -- always leaves compiler headroom.
    return int(min(96 * 1024 * 1024, (cap * 3) // 4))


def _pick_tb(batch, seq, dim, hidden, itemsize, vmem_limit_bytes):
    """Largest batch tile whose per-step residency fits the scoped-VMEM budget.

    Per-step residency as a function of tb:
      x tile      : 2 * tb*seq*dim*itemsize   (double-buffered input)
      ctx tile    : 2 * tb*seq*dim*itemsize   (double-buffered output)
      activations : tb*seq*(hidden + dim)*4   (tanh output + f32 ctx temp)
      attn tile   : 2 * tb*seq*4
    plus resident weights (single buffer): dim*hidden*4 + O(hidden).
    """
    budget = int(vmem_limit_bytes * 0.70)            # headroom for scratch/spills
    resident = dim * hidden * 4 + 4 * hidden * 4
    per_b = seq * (4 * dim * itemsize + (hidden + dim + 2) * 4)
    tb = (budget - resident) // max(1, per_b)
    tb = int(max(1, min(batch, tb)))

    # Guarantee >=2 grid steps for batch >= 16 so the "parallel" grid axis can
    # feed v7x's second TensorCore (no-op cost on v5e/v6e).
    if batch >= 16:
        tb = min(tb, max(8, (pl.cdiv(batch, 2) // 8) * 8))

    # Sublane alignment: the (tb, S) attn block needs tb % 8 == 0 unless tb == B
    # (which also makes the (tb*S, D) block the full array).
    if tb >= batch:
        return batch
    tb = (tb // 8) * 8
    if tb == 0:
        tb = min(8, batch)
    return tb


def attention_layer(x, w1, b1, w2, b2, *, tb=None):
    """x: (B, S, D); w1: (D, H); b1: (H,); w2: (H, 1); b2: (1,)."""
    B, S, D = x.shape
    H = w1.shape[1]

    x2 = x.reshape(B * S, D)            # free layout plumbing outside the kernel
    b1r = b1.reshape(1, H)
    w2r = w2.reshape(1, H)              # (H, 1) -> row vector for the VPU path
    b2s = b2.reshape(1)                 # scalar, lives in SMEM

    vmem_limit = _vmem_limit_bytes()
    if tb is None:
        tb = _pick_tb(B, S, D, H, x.dtype.itemsize, vmem_limit)
    grid_b = pl.cdiv(B, tb)

    kernel = functools.partial(attention_kernel, tb=tb, seq=S)

    def build(resident_weights):
        if resident_weights:
            # Whole array in VMEM, single buffer, copied in once (no per-step
            # pipelining for constant blocks).
            w1_spec = pl.BlockSpec(memory_space=pltpu.MemorySpace.VMEM)
            b1_spec = pl.BlockSpec(memory_space=pltpu.MemorySpace.VMEM)
            w2_spec = pl.BlockSpec(memory_space=pltpu.MemorySpace.VMEM)
        else:
            w1_spec = pl.BlockSpec((D, H), lambda i: (0, 0))
            b1_spec = pl.BlockSpec((1, H), lambda i: (0, 0))
            w2_spec = pl.BlockSpec((1, H), lambda i: (0, 0))
        return pl.pallas_call(
            kernel,
            out_shape=(
                jax.ShapeDtypeStruct((B * S, D), x.dtype),   # context (flat slab)
                jax.ShapeDtypeStruct((B, S), x.dtype),        # attn (lane-dense)
            ),
            grid_spec=pltpu.PrefetchScalarGridSpec(
                num_scalar_prefetch=0,
                grid=(grid_b,),
                in_specs=[
                    pl.BlockSpec((tb * S, D), lambda i: (i, 0)),        # x tile
                    w1_spec,
                    b1_spec,
                    w2_spec,
                    pl.BlockSpec(memory_space=pltpu.MemorySpace.SMEM),  # b2 scalar
                ],
                out_specs=[
                    pl.BlockSpec((tb * S, D), lambda i: (i, 0)),
                    pl.BlockSpec((tb, S), lambda i: (i, 0)),
                ],
            ),
            compiler_params=pltpu.CompilerParams(
                dimension_semantics=("parallel",),
                vmem_limit_bytes=vmem_limit,
            ),
        )

    try:
        ctx2, attn2 = build(True)(x2, w1, b1r, w2r, b2s)
    except Exception:
        # Fallback: blocked constant-index weight specs (double-buffered, but
        # guaranteed to lower on every generation).
        ctx2, attn2 = build(False)(x2, w1, b1r, w2r, b2s)

    return ctx2.reshape(B, S, D), attn2.reshape(B, S, 1)


def _reference(x, w1, b1, w2, b2):
    scores = jnp.tanh(x @ w1 + b1) @ w2 + b2               # (B, S, 1)
    attn = jax.nn.softmax(scores, axis=1)
    return attn * x, attn


if __name__ == "__main__":
    key = jax.random.PRNGKey(0)
    B, S, D = 2, 8, 32
    H = D // 2

    k_x, k_w1, k_b1, k_w2, k_b2 = jax.random.split(key, 5)
    x = jax.random.normal(k_x, (B, S, D), dtype=jnp.float32)
    # deterministic synthetic params (nn.Linear(D, D//2) / nn.Linear(D//2, 1))
    w1 = jax.random.normal(k_w1, (D, H), dtype=jnp.float32) * 0.1
    b1 = jax.random.normal(k_b1, (H,), dtype=jnp.float32) * 0.1
    w2 = jax.random.normal(k_w2, (H, 1), dtype=jnp.float32) * 0.1
    b2 = jax.random.normal(k_b2, (1,), dtype=jnp.float32) * 0.1

    ctx, attn = attention_layer(x, w1, b1, w2, b2)
    jax.block_until_ready((ctx, attn))

    ctx_ref, attn_ref = _reference(x, w1, b1, w2, b2)
    # approx (EUP) reciprocal in the softmax normalizer loosens tolerance slightly
    assert jnp.allclose(ctx, ctx_ref, atol=2e-3, rtol=2e-3)
    assert jnp.allclose(attn, attn_ref, atol=2e-3, rtol=2e-3)
    assert jnp.allclose(jnp.sum(attn, axis=1), 1.0, atol=1e-3)

    print("KERNEL_OK")
</pallas_src>

<mosaic_0001>
module attributes {stable_mosaic.version = 11 : i64} {
  func.func @attention_kernel(%arg0: i32, %arg1: memref<16x32xf32, #tpu.memory_space<vmem>>, %arg2: memref<32x16xf32, #tpu.memory_space<vmem>>, %arg3: memref<1x16xf32, #tpu.memory_space<vmem>>, %arg4: memref<1x16xf32, #tpu.memory_space<vmem>>, %arg5: memref<1xf32, #tpu.memory_space<smem>>, %arg6: memref<16x32xf32, #tpu.memory_space<vmem>>, %arg7: memref<2x8xf32, #tpu.memory_space<vmem>>) attributes {dimension_semantics = [#tpu.dimension_semantics<parallel>], iteration_bounds = array<i64: 1>, scalar_prefetch = 0 : i64, scratch_operands = 0 : i64, tpu.core_type = #tpu.core_type<tc>, window_params = [{transform_indices = @transform_0, window_bounds = array<i64: 16, 32>}, {pipeline_mode = #tpu.pipeline_mode<synchronous>, transform_indices = @transform_1, window_bounds = array<i64: 32, 16>}, {pipeline_mode = #tpu.pipeline_mode<synchronous>, transform_indices = @transform_2, window_bounds = array<i64: 1, 16>}, {pipeline_mode = #tpu.pipeline_mode<synchronous>, transform_indices = @transform_3, window_bounds = array<i64: 1, 16>}, {transform_indices = @transform_4, window_bounds = array<i64: 1>}, {transform_indices = @transform_5, window_bounds = array<i64: 16, 32>}, {transform_indices = @transform_6, window_bounds = array<i64: 2, 8>}]} {
    %c0 = arith.constant 0 : index
    %c0_0 = arith.constant 0 : index
    %0 = vector.load %arg1[%c0, %c0_0] : memref<16x32xf32, #tpu.memory_space<vmem>>, vector<16x32xf32>
    %c0_1 = arith.constant 0 : index
    %c0_2 = arith.constant 0 : index
    %1 = vector.load %arg2[%c0_1, %c0_2] : memref<32x16xf32, #tpu.memory_space<vmem>>, vector<32x16xf32>
    %cst = arith.constant dense<0.000000e+00> : vector<16x16xf32>
    %2 = tpu.matmul %0, %1, %cst {dimension_numbers = #tpu.dot_dimension_numbers<[1], [0], [0], [1], [0, 0, 1, 1], [], []>} : vector<16x32xf32>, vector<32x16xf32>, vector<16x16xf32> -> vector<16x16xf32>
    %c0_3 = arith.constant 0 : index
    %c0_4 = arith.constant 0 : index
    %3 = vector.load %arg3[%c0_3, %c0_4] : memref<1x16xf32, #tpu.memory_space<vmem>>, vector<1x16xf32>
    %4 = vector.broadcast %3 : vector<1x16xf32> to vector<16x16xf32>
    %5 = arith.addf %2, %4 : vector<16x16xf32>
    %6 = math.tanh %5 : vector<16x16xf32>
    %c0_5 = arith.constant 0 : index
    %c0_6 = arith.constant 0 : index
    %7 = vector.load %arg4[%c0_5, %c0_6] : memref<1x16xf32, #tpu.memory_space<vmem>>, vector<1x16xf32>
    %8 = vector.broadcast %7 : vector<1x16xf32> to vector<16x16xf32>
    %9 = arith.mulf %6, %8 : vector<16x16xf32>
    %cst_7 = arith.constant dense<0.000000e+00> : vector<16xf32>
    %10 = vector.multi_reduction <add>, %9, %cst_7 [1] : vector<16x16xf32> to vector<16xf32>
    %11 = vector.shape_cast %10 : vector<16xf32> to vector<16x1xf32>
    %c0_8 = arith.constant 0 : index
    %12 = memref.load %arg5[%c0_8] : memref<1xf32, #tpu.memory_space<smem>>
    %13 = vector.broadcast %12 : f32 to vector<16x1xf32>
    %14 = arith.addf %11, %13 : vector<16x1xf32>
    %15 = vector.shape_cast %14 : vector<16x1xf32> to vector<2x8xf32>
    %cst_9 = arith.constant dense<0xFF800000> : vector<2xf32>
    %16 = vector.multi_reduction <maximumf>, %15, %cst_9 [1] : vector<2x8xf32> to vector<2xf32>
    %17 = vector.shape_cast %16 : vector<2xf32> to vector<2x1xf32>
    %18 = vector.broadcast %17 : vector<2x1xf32> to vector<2x8xf32>
    %19 = arith.subf %15, %18 : vector<2x8xf32>
    %20 = math.exp %19 : vector<2x8xf32>
    %cst_10 = arith.constant dense<0.000000e+00> : vector<2xf32>
    %21 = vector.multi_reduction <add>, %20, %cst_10 [1] : vector<2x8xf32> to vector<2xf32>
    %22 = vector.shape_cast %21 : vector<2xf32> to vector<2x1xf32>
    %23 = tpu.reciprocal %22 {approx = true} : vector<2x1xf32> -> vector<2x1xf32>
    %24 = vector.broadcast %23 : vector<2x1xf32> to vector<2x8xf32>
    %25 = arith.mulf %20, %24 : vector<2x8xf32>
    %c0_11 = arith.constant 0 : index
    %c0_12 = arith.constant 0 : index
    %26 = vector.load %arg7[%c0_11, %c0_12] : memref<2x8xf32, #tpu.memory_space<vmem>>, vector<2x8xf32>
    tpu.vector_store %arg7[%c0_11, %c0_12], %25 {strides = array<i32>} : memref<2x8xf32, #tpu.memory_space<vmem>>, vector<2x8xf32>,
    %27 = vector.shape_cast %25 : vector<2x8xf32> to vector<16x1xf32>
    %c0_13 = arith.constant 0 : index
    %c0_14 = arith.constant 0 : index
    %28 = vector.load %arg1[%c0_13, %c0_14] : memref<16x32xf32, #tpu.memory_space<vmem>>, vector<16x32xf32>
    %29 = vector.broadcast %27 : vector<16x1xf32> to vector<16x32xf32>
    %30 = arith.mulf %29, %28 : vector<16x32xf32>
    %c0_15 = arith.constant 0 : index
    %c0_16 = arith.constant 0 : index
    %31 = vector.load %arg6[%c0_15, %c0_16] : memref<16x32xf32, #tpu.memory_space<vmem>>, vector<16x32xf32>
    tpu.vector_store %arg6[%c0_15, %c0_16], %30 {strides = array<i32>} : memref<16x32xf32, #tpu.memory_space<vmem>>, vector<16x32xf32>,
    return
  }
  func.func @transform_0(%arg0: i32) -> (i32, i32) {
    %c0_i32 = arith.constant 0 : i32
    %c0_i32_0 = arith.constant 0 : i32
    return %arg0, %c0_i32 : i32, i32
  }
  func.func @transform_1(%arg0: i32) -> (i32, i32) {
    %c0_i32 = arith.constant 0 : i32
    %c0_i32_0 = arith.constant 0 : i32
    %c0_i32_1 = arith.constant 0 : i32
    return %c0_i32, %c0_i32_0 : i32, i32
  }
  func.func @transform_2(%arg0: i32) -> (i32, i32) {
    %c0_i32 = arith.constant 0 : i32
    %c0_i32_0 = arith.constant 0 : i32
    %c0_i32_1 = arith.constant 0 : i32
    return %c0_i32, %c0_i32_0 : i32, i32
  }
  func.func @transform_3(%arg0: i32) -> (i32, i32) {
    %c0_i32 = arith.constant 0 : i32
    %c0_i32_0 = arith.constant 0 : i32
    %c0_i32_1 = arith.constant 0 : i32
    return %c0_i32, %c0_i32_0 : i32, i32
  }
  func.func @transform_4(%arg0: i32) -> i32 {
    %c0_i32 = arith.constant 0 : i32
    %c0_i32_0 = arith.constant 0 : i32
    return %c0_i32 : i32
  }
  func.func @transform_5(%arg0: i32) -> (i32, i32) {
    %c0_i32 = arith.constant 0 : i32
    %c0_i32_0 = arith.constant 0 : i32
    return %arg0, %c0_i32 : i32, i32
  }
  func.func @transform_6(%arg0: i32) -> (i32, i32) {
    %c0_i32 = arith.constant 0 : i32
    %c0_i32_0 = arith.constant 0 : i32
    return %arg0, %c0_i32 : i32, i32
  }
}

module attributes {stable_mosaic.version = 11 : i64} {
  func.func @attention_kernel(%arg0: i32, %arg1: memref<16x32xf32, #tpu.memory_space<vmem>>, %arg2: memref<32x16xf32, #tpu.memory_space<vmem>>, %arg3: memref<1x16xf32, #tpu.memory_space<vmem>>, %arg4: memref<1x16xf32, #tpu.memory_space<vmem>>, %arg5: memref<1xf32, #tpu.memory_space<smem>>, %arg6: memref<16x32xf32, #tpu.memory_space<vmem>>, %arg7: memref<2x8xf32, #tpu.memory_space<vmem>>) attributes {dimension_semantics = [#tpu.dimension_semantics<parallel>], iteration_bounds = array<i64: 1>, scalar_prefetch = 0 : i64, scratch_operands = 0 : i64, tpu.core_type = #tpu.core_type<tc>, window_params = [{transform_indices = @transform_0, window_bounds = array<i64: 16, 32>}, {pipeline_mode = #tpu.pipeline_mode<synchronous>, transform_indices = @transform_1, window_bounds = array<i64: 32, 16>}, {pipeline_mode = #tpu.pipeline_mode<synchronous>, transform_indices = @transform_2, window_bounds = array<i64: 1, 16>}, {pipeline_mode = #tpu.pipeline_mode<synchronous>, transform_indices = @transform_3, window_bounds = array<i64: 1, 16>}, {transform_indices = @transform_4, window_bounds = array<i64: 1>}, {transform_indices = @transform_5, window_bounds = array<i64: 16, 32>}, {transform_indices = @transform_6, window_bounds = array<i64: 2, 8>}]} {
    %c0 = arith.constant 0 : index
    %c0_0 = arith.constant 0 : index
    %0 = vector.load %arg1[%c0, %c0_0] : memref<16x32xf32, #tpu.memory_space<vmem>>, vector<16x32xf32>
    %c0_1 = arith.constant 0 : index
    %c0_2 = arith.constant 0 : index
    %1 = vector.load %arg2[%c0_1, %c0_2] : memref<32x16xf32, #tpu.memory_space<vmem>>, vector<32x16xf32>
    %cst = arith.constant dense<0.000000e+00> : vector<16x16xf32>
    %2 = tpu.matmul %0, %1, %cst {dimension_numbers = #tpu.dot_dimension_numbers<[1], [0], [0], [1], [0, 0, 1, 1], [], []>} : vector<16x32xf32>, vector<32x16xf32>, vector<16x16xf32> -> vector<16x16xf32>
    %c0_3 = arith.constant 0 : index
    %c0_4 = arith.constant 0 : index
    %3 = vector.load %arg3[%c0_3, %c0_4] : memref<1x16xf32, #tpu.memory_space<vmem>>, vector<1x16xf32>
    %4 = vector.broadcast %3 : vector<1x16xf32> to vector<16x16xf32>
    %5 = arith.addf %2, %4 : vector<16x16xf32>
    %6 = math.tanh %5 : vector<16x16xf32>
    %c0_5 = arith.constant 0 : index
    %c0_6 = arith.constant 0 : index
    %7 = vector.load %arg4[%c0_5, %c0_6] : memref<1x16xf32, #tpu.memory_space<vmem>>, vector<1x16xf32>
    %8 = vector.broadcast %7 : vector<1x16xf32> to vector<16x16xf32>
    %9 = arith.mulf %6, %8 : vector<16x16xf32>
    %cst_7 = arith.constant dense<0.000000e+00> : vector<16xf32>
    %10 = vector.multi_reduction <add>, %9, %cst_7 [1] : vector<16x16xf32> to vector<16xf32>
    %11 = vector.shape_cast %10 : vector<16xf32> to vector<16x1xf32>
    %c0_8 = arith.constant 0 : index
    %12 = memref.load %arg5[%c0_8] : memref<1xf32, #tpu.memory_space<smem>>
    %13 = vector.broadcast %12 : f32 to vector<16x1xf32>
    %14 = arith.addf %11, %13 : vector<16x1xf32>
    %15 = vector.shape_cast %14 : vector<16x1xf32> to vector<2x8xf32>
    %cst_9 = arith.constant dense<0xFF800000> : vector<2xf32>
    %16 = vector.multi_reduction <maximumf>, %15, %cst_9 [1] : vector<2x8xf32> to vector<2xf32>
    %17 = vector.shape_cast %16 : vector<2xf32> to vector<2x1xf32>
    %18 = vector.broadcast %17 : vector<2x1xf32> to vector<2x8xf32>
    %19 = arith.subf %15, %18 : vector<2x8xf32>
    %20 = math.exp %19 : vector<2x8xf32>
    %cst_10 = arith.constant dense<0.000000e+00> : vector<2xf32>
    %21 = vector.multi_reduction <add>, %20, %cst_10 [1] : vector<2x8xf32> to vector<2xf32>
    %22 = vector.shape_cast %21 : vector<2xf32> to vector<2x1xf32>
    %23 = tpu.reciprocal %22 {approx = true} : vector<2x1xf32> -> vector<2x1xf32>
    %24 = vector.broadcast %23 : vector<2x1xf32> to vector<2x8xf32>
    %25 = arith.mulf %20, %24 : vector<2x8xf32>
    %c0_11 = arith.constant 0 : index
    %c0_12 = arith.constant 0 : index
    %26 = vector.load %arg7[%c0_11, %c0_12] : memref<2x8xf32, #tpu.memory_space<vmem>>, vector<2x8xf32>
    tpu.vector_store %arg7[%c0_11, %c0_12], %25 {strides = array<i32>} : memref<2x8xf32, #tpu.memory_space<vmem>>, vector<2x8xf32>,
    %27 = vector.shape_cast %25 : vector<2x8xf32> to vector<16x1xf32>
    %c0_13 = arith.constant 0 : index
    %c0_14 = arith.constant 0 : index
    %28 = vector.load %arg1[%c0_13, %c0_14] : memref<16x32xf32, #tpu.memory_space<vmem>>, vector<16x32xf32>
    %29 = vector.broadcast %27 : vector<16x1xf32> to vector<16x32xf32>
    %30 = arith.mulf %29, %28 : vector<16x32xf32>
    %c0_15 = arith.constant 0 : index
    %c0_16 = arith.constant 0 : index
    %31 = vector.load %arg6[%c0_15, %c0_16] : memref<16x32xf32, #tpu.memory_space<vmem>>, vector<16x32xf32>
    tpu.vector_store %arg6[%c0_15, %c0_16], %30 {strides = array<i32>} : memref<16x32xf32, #tpu.memory_space<vmem>>, vector<16x32xf32>,
    return
  }
  func.func @transform_0(%arg0: i32) -> (i32, i32) {
    %c0_i32 = arith.constant 0 : i32
    %c0_i32_0 = arith.constant 0 : i32
    return %arg0, %c0_i32 : i32, i32
  }
  func.func @transform_1(%arg0: i32) -> (i32, i32) {
    %c0_i32 = arith.constant 0 : i32
    %c0_i32_0 = arith.constant 0 : i32
    %c0_i32_1 = arith.constant 0 : i32
    return %c0_i32, %c0_i32_0 : i32, i32
  }
  func.func @transform_2(%arg0: i32) -> (i32, i32) {
    %c0_i32 = arith.constant 0 : i32
    %c0_i32_0 = arith.constant 0 : i32
    %c0_i32_1 = arith.constant 0 : i32
    return %c0_i32, %c0_i32_0 : i32, i32
  }
  func.func @transform_3(%arg0: i32) -> (i32, i32) {
    %c0_i32 = arith.constant 0 : i32
    %c0_i32_0 = arith.constant 0 : i32
    %c0_i32_1 = arith.constant 0 : i32
    return %c0_i32, %c0_i32_0 : i32, i32
  }
  func.func @transform_4(%arg0: i32) -> i32 {
    %c0_i32 = arith.constant 0 : i32
    %c0_i32_0 = arith.constant 0 : i32
    return %c0_i32 : i32
  }
  func.func @transform_5(%arg0: i32) -> (i32, i32) {
    %c0_i32 = arith.constant 0 : i32
    %c0_i32_0 = arith.constant 0 : i32
    return %arg0, %c0_i32 : i32, i32
  }
  func.func @transform_6(%arg0: i32) -> (i32, i32) {
    %c0_i32 = arith.constant 0 : i32
    %c0_i32_0 = arith.constant 0 : i32
    return %arg0, %c0_i32 : i32, i32
  }
}

</mosaic_0001>

<llo_original>
// kernel: tpu_custom_call.1
$region0: #{tpu_custom_call.1}
  #allocation0 [shape = 'u32[]', space=smem, size = 0x4, offset = 0x4, fixed_abs, tag = 'smem constant byte address 0x4 - core index']
  #allocation1 [shape = 'u32[144,128]{1,0:T(1,128)}', space=vmem, size = 0x12000, scoped, tag = 'internal scratch']
  #allocation2 [shape = 'f32[1]{0:T(128)S(6)}', space=smem, size = 0x200, scoped, tag = 'scoped memory for tpu_custom_call.1']
  %s0 = inlined_call_operand.vmem [shape: f32[16,32], index: 0, kind: input, shape index: {}]
  %s1 = inlined_call_operand.vmem [shape: f32[32,16], index: 1, kind: input, shape index: {}]
  %s2 = inlined_call_operand.vmem [shape: f32[1,16], index: 2, kind: input, shape index: {}]
  %s3 = inlined_call_operand.vmem [shape: f32[1,16], index: 3, kind: input, shape index: {}]
  %s4 = inlined_call_operand.<no memory space> [shape: f32[1], index: 4, kind: input, shape index: {}]
  %s5 = inlined_call_operand.hbm [shape: f32[16,32], index: 5, kind: output, shape index: {0}]
  %s6 = inlined_call_operand.hbm [shape: f32[2,8], index: 6, kind: output, shape index: {1}]
  %7 = xla_tuple %s5, %s6
  %s8 = sld [smem:[#allocation0]]
  $region38: #{tpu_custom_call.1} parent=0
    _
  %s10 = ssub.s32 1, %s8
  %s11 = scalar_select 0, %s10, %s8
  %12 = sst [smem:[#allocation2]] %s4
  $region1: #{tpu_custom_call.1} parent=0
    #allocation3 [shape = 'u8[8192]{0}', space=vmem, size = 0x2000, scoped, tag = 'output window, operand 0, single buffered']
    #allocation4 [shape = 's32[1]{0}', space=sflag, size = 0x4, scoped, tag = 'scoped memory for tpu_custom_call.1']
    #allocation5 [shape = 'u8[1024]{0}', space=vmem, size = 0x400, scoped, tag = 'output window, operand 1, single buffered']
    #allocation6 [shape = 's32[1]{0}', space=sflag, size = 0x4, scoped, tag = 'scoped memory for tpu_custom_call.1']
    %13 = vsyncpa [#allocation4], 0
    %14 = vsyncpa [#allocation6], 0
    // Predicated region
    $region2: #{tpu_custom_call.1} parent=1 // pred_check
      _
    $region3: #{tpu_custom_call.1} parent=1 // pred_check_branch
      %16 = sbr.rel (0) target = $region5
    $region4: #{tpu_custom_call.1} parent=1 // pred_region
      _
    $region5: #{tpu_custom_call.1} parent=1 // pred_fallthru
      _
    // Predicated region
    $region6: #{tpu_custom_call.1} parent=1 // pred_check
      _
    $region7: #{tpu_custom_call.1} parent=1 // pred_check_branch
      %18 = sbr.rel (0) target = $region9
    $region8: #{tpu_custom_call.1} parent=1 // pred_region
      _
    $region9: #{tpu_custom_call.1} parent=1 // pred_fallthru
      _
    // Predicated region
    $region10: #{tpu_custom_call.1} parent=1 // pred_check
      _
    $region11: #{tpu_custom_call.1} parent=1 // pred_check_branch
      %20 = sbr.rel (0) target = $region13
    $region12: #{tpu_custom_call.1} parent=1 // pred_region
      _
    $region13: #{tpu_custom_call.1} parent=1 // pred_fallthru
      _
    // Predicated region
    $region14: #{tpu_custom_call.1} parent=1 // pred_check
      _
    $region15: #{tpu_custom_call.1} parent=1 // pred_check_branch
      %22 = sbr.rel (0) target = $region17
    $region16: #{tpu_custom_call.1} parent=1 // pred_region
      _
    $region17: #{tpu_custom_call.1} parent=1 // pred_fallthru
      _
    // Predicated region
    $region18: #{tpu_custom_call.1} parent=1 // pred_check
      _
    $region19: #{tpu_custom_call.1} parent=1 // pred_check_branch
      %24 = sbr.rel (0) target = $region21
    $region20: #{tpu_custom_call.1} parent=1 // pred_region
      _
    $region21: #{tpu_custom_call.1} parent=1 // pred_fallthru
      _
    %v25 = vld [vmem:[%s0] sm:$0xff]
    %v26 = vld [vmem:[%s0 + $0x8] sm:$0xff]
    %v27 = vld [vmem:[%s1] sm:$0xff]
    %v28 = vld [vmem:[%s1 + $0x8] sm:$0xff]
    %v29 = vld [vmem:[%s1 + $0x10] sm:$0xff]
    %v30 = vld [vmem:[%s1 + $0x18] sm:$0xff]
    %v31 = vld [vmem:[%s2] sm:$0x1]
    %v33 = vlaneseq
    %v34 = vshrl.u32 %v33, 7
    %v35 = vsub.s32 0, %v34
    %v36 = vrot.slane %v31, %v35
    %vm38 = vcmask 261120
    %v40 = vsel %vm38, %v25, 0
    %v43 = vsel %vm38, %v26, 0
    %45 = vmatprep.subr.mxu0 0.0
    %46 = vmatpush1.msra.mxu0 %v27
    %47 = vmatprep.subr.mxu0 0.0
    %48 = vmatpush1.msra.mxu0 %v28
    %49 = vmatprep.subr.mxu0 0.0
    %50 = vmatpush1.msra.mxu0 %v29
    %51 = vmatprep.subr.mxu0 0.0
    %52 = vmatpush1.msra.mxu0 %v30
    %53 = vmatprep.subr.mxu0 0.0
    %54 = vmatpush1.msra.mxu0 0.0
    %55 = vmatprep.subr.mxu0 0.0
    %56 = vmatpush1.msra.mxu0 0.0
    %57 = vmatprep.subr.mxu0 0.0
    %58 = vmatpush1.msra.mxu0 0.0
    %59 = vmatprep.subr.mxu0 0.0
    %60 = vmatpush1.msra.mxu0 0.0
    %61 = vmatprep.subr.mxu0 0.0
    %62 = vmatpush1.msra.mxu0 0.0
    %63 = vmatprep.subr.mxu0 0.0
    %64 = vmatpush1.msra.mxu0 0.0
    %65 = vmatprep.subr.mxu0 0.0
    %66 = vmatpush1.msra.mxu0 0.0
    %67 = vmatprep.subr.mxu0 0.0
    %68 = vmatpush1.msra.mxu0 0.0
    %69 = vmatprep.subr.mxu0 0.0
    %70 = vmatpush1.msra.mxu0 0.0
    %71 = vmatprep.subr.mxu0 0.0
    %72 = vmatpush1.msra.mxu0 0.0
    %73 = vmatprep.subr.mxu0 0.0
    %74 = vmatpush1.msra.mxu0 0.0
    %75 = vmatprep.subr.mxu0 0.0
    %76 = vmatpush1.msra.mxu0 0.0
    %77 = vmatprep.subr.mxu0 0.0
    %78 = vmatpush1.msra.mxu0 0.0
    %79 = vmatprep.subr.mxu0 0.0
    %80 = vmatpush1.msra.mxu0 0.0
    %81 = vmatprep.subr.mxu0 0.0
    %82 = vmatpush1.msra.mxu0 0.0
    %83 = vmatprep.subr.mxu0 0.0
    %84 = vmatpush1.msra.mxu0 0.0
    %85 = vmatprep.subr.mxu0 0.0
    %86 = vmatpush1.msra.mxu0 0.0
    %87 = vmatprep.subr.mxu0 0.0
    %88 = vmatpush1.msra.mxu0 0.0
    %89 = vmatprep.subr.mxu0 0.0
    %90 = vmatpush1.msra.mxu0 0.0
    %91 = vmatprep.subr.mxu0 0.0
    %92 = vmatpush1.msra.mxu0 0.0
    %93 = vmatprep.subr.mxu0 0.0
    %94 = vmatpush1.msra.mxu0 0.0
    %95 = vmatprep.subr.mxu0 0.0
    %96 = vmatpush1.msra.mxu0 0.0
    %97 = vmatprep.subr.mxu0 0.0
    %98 = vmatpush1.msra.mxu0 0.0
    %99 = vmatprep.subr.mxu0 0.0
    %100 = vmatpush1.msra.mxu0 0.0
    %101 = vmatprep.subr.mxu0 0.0
    %102 = vmatpush1.msra.mxu0 0.0
    %103 = vmatprep.subr.mxu0 0.0
    %104 = vmatpush1.msra.mxu0 0.0
    %105 = vmatprep.subr.mxu0 0.0
    %106 = vmatpush1.msra.mxu0 0.0
    %107 = vmatprep.subr.mxu0 0.0
    %108 = vmatpush1.msra.mxu0 0.0
    %109 = vmatprep.mubr.f32.mxu0 0.0
    %110 = vmatmul.mubr.f32.gmra.mrb[0].mxu0 %v40
    %v111 = vpop.f32.mrb[0].mxu0
    %v112 = vadd.f32 %v36, %v111
    %v113 = vpop.f32.mrb[0].mxu0
    %114 = vmatprep.mubr.f32.mxu0 0.0
    %115 = vmatmul.mubr.f32.gmra.mrb[0].mxu0 %v43
    %v116 = vpop.f32.mrb[0].mxu0
    %v117 = vadd.f32 %v36, %v116
    %v118 = vpop.f32.mrb[0].mxu0
    %119 = vdwg.mxu0
    %v120 = vtanh.pop %v112
    %v121 = vtanh.pop %v117
    %v122 = vld [vmem:[%s3] sm:$0x1]
    %v124 = vlaneseq
    %v125 = vshrl.u32 %v124, 7
    %v126 = vsub.s32 0, %v125
    %v127 = vrot.slane %v122, %v126
    %v129 = vmul.f32 %v120, %v127
    %v130 = vmul.f32 %v121, %v127
    %vm131 = vcmask 130048
    %v132 = vsel %vm131, %v129, 0.0
    %133 = vadd.xlane.f32.xlu0 %v132
    %v134 = vpop.xlane.xlu0 %133
    %v135 = vsel %vm131, %v130, 0.0
    %136 = vadd.xlane.f32.xlu0 %v135
    %v137 = vpop.xlane.xlu0 %136
    %s138 = sld [smem:[#allocation2]]
    %v139 = vstv %s138
    %v140 = vadd.f32 %v134, %v139
    %v141 = vadd.f32 %v137, %v139
    %v144 = vlaneseq
    %v145 = vand.u32 %v144, 127
    %v146 = vlaneseq
    %v147 = vshrl.u32 %v146, 7
    %v148 = vsub.s32 %v145, %v147
    %v149 = vrot.slane %v140, %v148
    %v150 = vlaneseq
    %v151 = vshrl.u32 %v150, 7
    %v152 = vsub.s32 %v145, %v151
    %v153 = vrot.slane %v141, %v152
    %vm154 = vcmask 1041409
    %v155 = vsel %vm154, %v153, %v149
    %vm157 = vcmask 58368
    %v158 = vsel %vm157, %v155, -inf
    %159 = vmax.xlane.f32.xlu0 %v158
    %v160 = vpop.xlane.xlu0 %159
    %v162 = vlaneseq
    %v163 = vshrl.u32 %v162, 7
    %v164 = vsub.s32 0, %v163
    %v165 = vrot.slane %v160, %v164
    %v166 = vlaneseq
    %v167 = vshrl.u32 %v166, 7
    %v168 = vsub.s32 1, %v167
    %v169 = vrot.slane %v160, %v168
    %v172 = vsub.f32 %v140, %v165
    %v173 = vsub.f32 %v141, %v169
    %v174 = vmul.f32 %v172, 1.442695
    %v175 = vpow.pop %v174
    %v176 = vmul.f32 %v173, 1.442695
    %v177 = vpow.pop %v176
    %180 = vset.pattern.permute.xlu0 0
    %181 = vperm.xlu0 %180, %v175
    %v182 = vpop.permute.xlu0 %181
    %183 = vset.pattern.permute.xlu0 0
    %184 = vperm.xlu0 %183, %v177
    %v185 = vpop.permute.xlu0 %184
    %v186 = vlaneseq
    %v187 = vshrl.u32 %v186, 7
    %v188 = vsub.s32 %v145, %v187
    %v189 = vrot.slane %v182, %v188
    %v190 = vlaneseq
    %v191 = vshrl.u32 %v190, 7
    %v192 = vsub.s32 %v145, %v191
    %v193 = vrot.slane %v185, %v192
    %v194 = vsel %vm154, %v193, %v189
    %v196 = vsel %vm157, %v194, 0.0
    %197 = vadd.xlane.f32.xlu0 %v196
    %v198 = vpop.xlane.xlu0 %197
    %v199 = vrcp.pop %v198
    %v201 = vlaneseq
    %v202 = vshrl.u32 %v201, 7
    %v203 = vsub.s32 0, %v202
    %v204 = vrot.slane %v199, %v203
    %v205 = vlaneseq
    %v206 = vshrl.u32 %v205, 7
    %v207 = vsub.s32 1, %v206
    %v208 = vrot.slane %v199, %v207
    %v211 = vmul.f32 %v175, %v204
    %v212 = vmul.f32 %v177, %v208
    %215 = vset.pattern.permute.xlu0 0
    %216 = vperm.xlu0 %215, %v211
    %v217 = vpop.permute.xlu0 %216
    %218 = vset.pattern.permute.xlu0 0
    %219 = vperm.xlu0 %218, %v212
    %v220 = vpop.permute.xlu0 %219
    %v221 = vlaneseq
    %v222 = vshrl.u32 %v221, 7
    %v223 = vsub.s32 %v145, %v222
    %v224 = vrot.slane %v217, %v223
    %v225 = vlaneseq
    %v226 = vshrl.u32 %v225, 7
    %v227 = vsub.s32 %v145, %v226
    %v228 = vrot.slane %v220, %v227
    %v229 = vsel %vm154, %v228, %v224
    %231 = vst.msk [vmem:[#allocation5] sm:$0x3] %vm157, %v229
    %v232 = vld [vmem:[%s0] sm:$0xff]
    %v233 = vld [vmem:[%s0 + $0x8] sm:$0xff]
    %v236 = vmul.f32 %v217, %v232
    %v237 = vmul.f32 %v220, %v233
    %238 = vst.msk [vmem:[#allocation3] sm:$0xff] %vm38, %v236
    %239 = vst.msk [vmem:[#allocation3 + $0x8] sm:$0xff] %vm38, %v237
    // Predicated region
    $region22: #{tpu_custom_call.1} parent=1 // pred_check
      _
    $region23: #{tpu_custom_call.1} parent=1 // pred_check_branch
      %241 = sbr.rel (0) target = $region25
    $region24: #{tpu_custom_call.1} parent=1 // pred_region
      %s243 = ssub.s32 256, 256
      %244 = vsyncadd [#allocation4], %s243
      %s245 = sshll.u32 [#allocation3], 4
      %s246 = int_to_ptr.vmem [resolvable:$true] %s245
      %251 = dma.vmem_to_hbm [thread:$0]  %s246, 256, %s5, [#allocation4], 128, 128, 8
    $region25: #{tpu_custom_call.1} parent=1 // pred_fallthru
      _
    // Predicated region
    $region26: #{tpu_custom_call.1} parent=1 // pred_check
      _
    $region27: #{tpu_custom_call.1} parent=1 // pred_check_branch
      %253 = sbr.rel (0) target = $region29
    $region28: #{tpu_custom_call.1} parent=1 // pred_region
      %s255 = ssub.s32 32, 32
      %256 = vsyncadd [#allocation6], %s255
      %s258 = sshll.u32 [#allocation5], 4
      %s259 = int_to_ptr.vmem [resolvable:$true] %s258
      %261 = dma.vmem_to_hbm [thread:$0]  %s259, 32, %s6, [#allocation6]
    $region29: #{tpu_custom_call.1} parent=1 // pred_fallthru
      _
    // Predicated region
    $region30: #{tpu_custom_call.1} parent=1 // pred_check
      _
    $region31: #{tpu_custom_call.1} parent=1 // pred_check_branch
      %263 = sbr.rel (0) target = $region33
    $region32: #{tpu_custom_call.1} parent=1 // pred_region
      %264 = dma.done [#allocation4], 256
    $region33: #{tpu_custom_call.1} parent=1 // pred_fallthru
      _
    // Predicated region
    $region34: #{tpu_custom_call.1} parent=1 // pred_check
      _
    $region35: #{tpu_custom_call.1} parent=1 // pred_check_branch
      %266 = sbr.rel (0) target = $region37
    $region36: #{tpu_custom_call.1} parent=1 // pred_region
      %267 = dma.done [#allocation6], 32
    $region37: #{tpu_custom_call.1} parent=1 // pred_fallthru
      _
    %268 = vsyncpa [#allocation4], 1
    %269 = vsyncpa [#allocation6], 1

// kernel: tpu_custom_call.1
$region0: #{tpu_custom_call.1}
  #allocation0 [shape = 'u32[]', space=smem, size = 0x4, offset = 0x4, fixed_abs, tag = 'smem constant byte address 0x4 - core index']
  #allocation1 [shape = 'u32[144,128]{1,0:T(1,128)}', space=vmem, size = 0x12000, scoped, tag = 'internal scratch']
  #allocation2 [shape = 'f32[1]{0:T(128)S(6)}', space=smem, size = 0x200, scoped, tag = 'scoped memory for tpu_custom_call.1']
  %s0 = inlined_call_operand.vmem [shape: f32[16,32], index: 0, kind: input, shape index: {}]
  %s1 = inlined_call_operand.vmem [shape: f32[32,16], index: 1, kind: input, shape index: {}]
  %s2 = inlined_call_operand.vmem [shape: f32[1,16], index: 2, kind: input, shape index: {}]
  %s3 = inlined_call_operand.vmem [shape: f32[1,16], index: 3, kind: input, shape index: {}]
  %s4 = inlined_call_operand.<no memory space> [shape: f32[1], index: 4, kind: input, shape index: {}]
  %s5 = inlined_call_operand.hbm [shape: f32[16,32], index: 5, kind: output, shape index: {0}]
  %s6 = inlined_call_operand.hbm [shape: f32[2,8], index: 6, kind: output, shape index: {1}]
  %7 = xla_tuple %s5, %s6
  %s8 = sld [smem:[#allocation0]]
  $region38: #{tpu_custom_call.1} parent=0
    _
  %s10 = ssub.s32 1, %s8
  %s11 = scalar_select 0, %s10, %s8
  %12 = sst [smem:[#allocation2]] %s4
  $region1: #{tpu_custom_call.1} parent=0
    #allocation3 [shape = 'u8[8192]{0}', space=vmem, size = 0x2000, scoped, tag = 'output window, operand 0, single buffered']
    #allocation4 [shape = 's32[1]{0}', space=sflag, size = 0x4, scoped, tag = 'scoped memory for tpu_custom_call.1']
    #allocation5 [shape = 'u8[1024]{0}', space=vmem, size = 0x400, scoped, tag = 'output window, operand 1, single buffered']
    #allocation6 [shape = 's32[1]{0}', space=sflag, size = 0x4, scoped, tag = 'scoped memory for tpu_custom_call.1']
    %13 = vsyncpa [#allocation4], 0
    %14 = vsyncpa [#allocation6], 0
    // Predicated region
    $region2: #{tpu_custom_call.1} parent=1 // pred_check
      _
    $region3: #{tpu_custom_call.1} parent=1 // pred_check_branch
      %16 = sbr.rel (0) target = $region5
    $region4: #{tpu_custom_call.1} parent=1 // pred_region
      _
    $region5: #{tpu_custom_call.1} parent=1 // pred_fallthru
      _
    // Predicated region
    $region6: #{tpu_custom_call.1} parent=1 // pred_check
      _
    $region7: #{tpu_custom_call.1} parent=1 // pred_check_branch
      %18 = sbr.rel (0) target = $region9
    $region8: #{tpu_custom_call.1} parent=1 // pred_region
      _
    $region9: #{tpu_custom_call.1} parent=1 // pred_fallthru
      _
    // Predicated region
    $region10: #{tpu_custom_call.1} parent=1 // pred_check
      _
    $region11: #{tpu_custom_call.1} parent=1 // pred_check_branch
      %20 = sbr.rel (0) target = $region13
    $region12: #{tpu_custom_call.1} parent=1 // pred_region
      _
    $region13: #{tpu_custom_call.1} parent=1 // pred_fallthru
      _
    // Predicated region
    $region14: #{tpu_custom_call.1} parent=1 // pred_check
      _
    $region15: #{tpu_custom_call.1} parent=1 // pred_check_branch
      %22 = sbr.rel (0) target = $region17
    $region16: #{tpu_custom_call.1} parent=1 // pred_region
      _
    $region17: #{tpu_custom_call.1} parent=1 // pred_fallthru
      _
    // Predicated region
    $region18: #{tpu_custom_call.1} parent=1 // pred_check
      _
    $region19: #{tpu_custom_call.1} parent=1 // pred_check_branch
      %24 = sbr.rel (0) target = $region21
    $region20: #{tpu_custom_call.1} parent=1 // pred_region
      _
    $region21: #{tpu_custom_call.1} parent=1 // pred_fallthru
      _
    %v25 = vld [vmem:[%s0] sm:$0xff]
    %v26 = vld [vmem:[%s0 + $0x8] sm:$0xff]
    %v27 = vld [vmem:[%s1] sm:$0xff]
    %v28 = vld [vmem:[%s1 + $0x8] sm:$0xff]
    %v29 = vld [vmem:[%s1 + $0x10] sm:$0xff]
    %v30 = vld [vmem:[%s1 + $0x18] sm:$0xff]
    %v31 = vld [vmem:[%s2] sm:$0x1]
    %v33 = vlaneseq
    %v34 = vshrl.u32 %v33, 7
    %v35 = vsub.s32 0, %v34
    %v36 = vrot.slane %v31, %v35
    %vm38 = vcmask 261120
    %v40 = vsel %vm38, %v25, 0
    %v43 = vsel %vm38, %v26, 0
    %45 = vmatprep.subr.mxu0 0.0
    %46 = vmatpush1.msra.mxu0 %v27
    %47 = vmatprep.subr.mxu0 0.0
    %48 = vmatpush1.msra.mxu0 %v28
    %49 = vmatprep.subr.mxu0 0.0
    %50 = vmatpush1.msra.mxu0 %v29
    %51 = vmatprep.subr.mxu0 0.0
    %52 = vmatpush1.msra.mxu0 %v30
    %53 = vmatprep.subr.mxu0 0.0
    %54 = vmatpush1.msra.mxu0 0.0
    %55 = vmatprep.subr.mxu0 0.0
    %56 = vmatpush1.msra.mxu0 0.0
    %57 = vmatprep.subr.mxu0 0.0
    %58 = vmatpush1.msra.mxu0 0.0
    %59 = vmatprep.subr.mxu0 0.0
    %60 = vmatpush1.msra.mxu0 0.0
    %61 = vmatprep.subr.mxu0 0.0
    %62 = vmatpush1.msra.mxu0 0.0
    %63 = vmatprep.subr.mxu0 0.0
    %64 = vmatpush1.msra.mxu0 0.0
    %65 = vmatprep.subr.mxu0 0.0
    %66 = vmatpush1.msra.mxu0 0.0
    %67 = vmatprep.subr.mxu0 0.0
    %68 = vmatpush1.msra.mxu0 0.0
    %69 = vmatprep.subr.mxu0 0.0
    %70 = vmatpush1.msra.mxu0 0.0
    %71 = vmatprep.subr.mxu0 0.0
    %72 = vmatpush1.msra.mxu0 0.0
    %73 = vmatprep.subr.mxu0 0.0
    %74 = vmatpush1.msra.mxu0 0.0
    %75 = vmatprep.subr.mxu0 0.0
    %76 = vmatpush1.msra.mxu0 0.0
    %77 = vmatprep.subr.mxu0 0.0
    %78 = vmatpush1.msra.mxu0 0.0
    %79 = vmatprep.subr.mxu0 0.0
    %80 = vmatpush1.msra.mxu0 0.0
    %81 = vmatprep.subr.mxu0 0.0
    %82 = vmatpush1.msra.mxu0 0.0
    %83 = vmatprep.subr.mxu0 0.0
    %84 = vmatpush1.msra.mxu0 0.0
    %85 = vmatprep.subr.mxu0 0.0
    %86 = vmatpush1.msra.mxu0 0.0
    %87 = vmatprep.subr.mxu0 0.0
    %88 = vmatpush1.msra.mxu0 0.0
    %89 = vmatprep.subr.mxu0 0.0
    %90 = vmatpush1.msra.mxu0 0.0
    %91 = vmatprep.subr.mxu0 0.0
    %92 = vmatpush1.msra.mxu0 0.0
    %93 = vmatprep.subr.mxu0 0.0
    %94 = vmatpush1.msra.mxu0 0.0
    %95 = vmatprep.subr.mxu0 0.0
    %96 = vmatpush1.msra.mxu0 0.0
    %97 = vmatprep.subr.mxu0 0.0
    %98 = vmatpush1.msra.mxu0 0.0
    %99 = vmatprep.subr.mxu0 0.0
    %100 = vmatpush1.msra.mxu0 0.0
    %101 = vmatprep.subr.mxu0 0.0
    %102 = vmatpush1.msra.mxu0 0.0
    %103 = vmatprep.subr.mxu0 0.0
    %104 = vmatpush1.msra.mxu0 0.0
    %105 = vmatprep.subr.mxu0 0.0
    %106 = vmatpush1.msra.mxu0 0.0
    %107 = vmatprep.subr.mxu0 0.0
    %108 = vmatpush1.msra.mxu0 0.0
    %109 = vmatprep.mubr.f32.mxu0 0.0
    %110 = vmatmul.mubr.f32.gmra.mrb[0].mxu0 %v40
    %v111 = vpop.f32.mrb[0].mxu0
    %v112 = vadd.f32 %v36, %v111
    %v113 = vpop.f32.mrb[0].mxu0
    %114 = vmatprep.mubr.f32.mxu0 0.0
    %115 = vmatmul.mubr.f32.gmra.mrb[0].mxu0 %v43
    %v116 = vpop.f32.mrb[0].mxu0
    %v117 = vadd.f32 %v36, %v116
    %v118 = vpop.f32.mrb[0].mxu0
    %119 = vdwg.mxu0
    %v120 = vtanh.pop %v112
    %v121 = vtanh.pop %v117
    %v122 = vld [vmem:[%s3] sm:$0x1]
    %v124 = vlaneseq
    %v125 = vshrl.u32 %v124, 7
    %v126 = vsub.s32 0, %v125
    %v127 = vrot.slane %v122, %v126
    %v129 = vmul.f32 %v120, %v127
    %v130 = vmul.f32 %v121, %v127
    %vm131 = vcmask 130048
    %v132 = vsel %vm131, %v129, 0.0
    %133 = vadd.xlane.f32.xlu0 %v132
    %v134 = vpop.xlane.xlu0 %133
    %v135 = vsel %vm131, %v130, 0.0
    %136 = vadd.xlane.f32.xlu0 %v135
    %v137 = vpop.xlane.xlu0 %136
    %s138 = sld [smem:[#allocation2]]
    %v139 = vstv %s138
    %v140 = vadd.f32 %v134, %v139
    %v141 = vadd.f32 %v137, %v139
    %v144 = vlaneseq
    %v145 = vand.u32 %v144, 127
    %v146 = vlaneseq
    %v147 = vshrl.u32 %v146, 7
    %v148 = vsub.s32 %v145, %v147
    %v149 = vrot.slane %v140, %v148
    %v150 = vlaneseq
    %v151 = vshrl.u32 %v150, 7
    %v152 = vsub.s32 %v145, %v151
    %v153 = vrot.slane %v141, %v152
    %vm154 = vcmask 1041409
    %v155 = vsel %vm154, %v153, %v149
    %vm157 = vcmask 58368
    %v158 = vsel %vm157, %v155, -inf
    %159 = vmax.xlane.f32.xlu0 %v158
    %v160 = vpop.xlane.xlu0 %159
    %v162 = vlaneseq
    %v163 = vshrl.u32 %v162, 7
    %v164 = vsub.s32 0, %v163
    %v165 = vrot.slane %v160, %v164
    %v166 = vlaneseq
    %v167 = vshrl.u32 %v166, 7
    %v168 = vsub.s32 1, %v167
    %v169 = vrot.slane %v160, %v168
    %v172 = vsub.f32 %v140, %v165
    %v173 = vsub.f32 %v141, %v169
    %v174 = vmul.f32 %v172, 1.442695
    %v175 = vpow.pop %v174
    %v176 = vmul.f32 %v173, 1.442695
    %v177 = vpow.pop %v176
    %180 = vset.pattern.permute.xlu0 0
    %181 = vperm.xlu0 %180, %v175
    %v182 = vpop.permute.xlu0 %181
    %183 = vset.pattern.permute.xlu0 0
    %184 = vperm.xlu0 %183, %v177
    %v185 = vpop.permute.xlu0 %184
    %v186 = vlaneseq
    %v187 = vshrl.u32 %v186, 7
    %v188 = vsub.s32 %v145, %v187
    %v189 = vrot.slane %v182, %v188
    %v190 = vlaneseq
    %v191 = vshrl.u32 %v190, 7
    %v192 = vsub.s32 %v145, %v191
    %v193 = vrot.slane %v185, %v192
    %v194 = vsel %vm154, %v193, %v189
    %v196 = vsel %vm157, %v194, 0.0
    %197 = vadd.xlane.f32.xlu0 %v196
    %v198 = vpop.xlane.xlu0 %197
    %v199 = vrcp.pop %v198
    %v201 = vlaneseq
    %v202 = vshrl.u32 %v201, 7
    %v203 = vsub.s32 0, %v202
    %v204 = vrot.slane %v199, %v203
    %v205 = vlaneseq
    %v206 = vshrl.u32 %v205, 7
    %v207 = vsub.s32 1, %v206
    %v208 = vrot.slane %v199, %v207
    %v211 = vmul.f32 %v175, %v204
    %v212 = vmul.f32 %v177, %v208
    %215 = vset.pattern.permute.xlu0 0
    %216 = vperm.xlu0 %215, %v211
    %v217 = vpop.permute.xlu0 %216
    %218 = vset.pattern.permute.xlu0 0
    %219 = vperm.xlu0 %218, %v212
    %v220 = vpop.permute.xlu0 %219
    %v221 = vlaneseq
    %v222 = vshrl.u32 %v221, 7
    %v223 = vsub.s32 %v145, %v222
    %v224 = vrot.slane %v217, %v223
    %v225 = vlaneseq
    %v226 = vshrl.u32 %v225, 7
    %v227 = vsub.s32 %v145, %v226
    %v228 = vrot.slane %v220, %v227
    %v229 = vsel %vm154, %v228, %v224
    %231 = vst.msk [vmem:[#allocation5] sm:$0x3] %vm157, %v229
    %v232 = vld [vmem:[%s0] sm:$0xff]
    %v233 = vld [vmem:[%s0 + $0x8] sm:$0xff]
    %v236 = vmul.f32 %v217, %v232
    %v237 = vmul.f32 %v220, %v233
    %238 = vst.msk [vmem:[#allocation3] sm:$0xff] %vm38, %v236
    %239 = vst.msk [vmem:[#allocation3 + $0x8] sm:$0xff] %vm38, %v237
    // Predicated region
    $region22: #{tpu_custom_call.1} parent=1 // pred_check
      _
    $region23: #{tpu_custom_call.1} parent=1 // pred_check_branch
      %241 = sbr.rel (0) target = $region25
    $region24: #{tpu_custom_call.1} parent=1 // pred_region
      %s243 = ssub.s32 256, 256
      %244 = vsyncadd [#allocation4], %s243
      %s245 = sshll.u32 [#allocation3], 4
      %s246 = int_to_ptr.vmem [resolvable:$true] %s245
      %251 = dma.vmem_to_hbm [thread:$0]  %s246, 256, %s5, [#allocation4], 128, 128, 8
    $region25: #{tpu_custom_call.1} parent=1 // pred_fallthru
      _
    // Predicated region
    $region26: #{tpu_custom_call.1} parent=1 // pred_check
      _
    $region27: #{tpu_custom_call.1} parent=1 // pred_check_branch
      %253 = sbr.rel (0) target = $region29
    $region28: #{tpu_custom_call.1} parent=1 // pred_region
      %s255 = ssub.s32 32, 32
      %256 = vsyncadd [#allocation6], %s255
      %s258 = sshll.u32 [#allocation5], 4
      %s259 = int_to_ptr.vmem [resolvable:$true] %s258
      %261 = dma.vmem_to_hbm [thread:$0]  %s259, 32, %s6, [#allocation6]
    $region29: #{tpu_custom_call.1} parent=1 // pred_fallthru
      _
    // Predicated region
    $region30: #{tpu_custom_call.1} parent=1 // pred_check
      _
    $region31: #{tpu_custom_call.1} parent=1 // pred_check_branch
      %263 = sbr.rel (0) target = $region33
    $region32: #{tpu_custom_call.1} parent=1 // pred_region
      %264 = dma.done [#allocation4], 256
    $region33: #{tpu_custom_call.1} parent=1 // pred_fallthru
      _
    // Predicated region
    $region34: #{tpu_custom_call.1} parent=1 // pred_check
      _
    $region35: #{tpu_custom_call.1} parent=1 // pred_check_branch
      %266 = sbr.rel (0) target = $region37
    $region36: #{tpu_custom_call.1} parent=1 // pred_region
      %267 = dma.done [#allocation6], 32
    $region37: #{tpu_custom_call.1} parent=1 // pred_fallthru
      _
    %268 = vsyncpa [#allocation4], 1
    %269 = vsyncpa [#allocation6], 1

</llo_original>
